<compile_context>
chip_gen: v6e
topology: v6e:2x2x1
jax: 0.10.0
libtpu: 0.0.40
codegen_flags: <defaults>
</compile_context>

<pallas_src>
import jax
import jax.numpy as jnp
from jax.experimental import pallas as pl
from jax.experimental.pallas import tpu as pltpu


def _make_kernel(total_batch: int, block_batch: int):
    need_batch_mask = (total_batch % block_batch) != 0

    def kernel(pred_ref, gt_ref, src_ref, tgt_ref, row_ref, col_ref, acc_ref):
        g = pl.program_id(0)

        @pl.when(g == 0)
        def _():
            acc_ref[...] = jnp.zeros_like(acc_ref)

        pred = pred_ref[...].astype(jnp.float32)      # (TB, L)
        gt = gt_ref[...].astype(jnp.float32)          # (TB, L)

        src_lim = src_ref[...]                        # (TB, 1) int32
        tgt_lim = tgt_ref[...]                        # (TB, 1) int32
        row_idx = row_ref[...]                        # (1, L)  int32
        col_idx = col_ref[...]                        # (1, L)  int32

        # Validity mask: (row < src_ns[b]) & (col < tgt_ns[b]) (& batch < B for
        # the ragged last block).  Broadcast (TB,1) against (1,L) -> (TB,L).
        mask = (row_idx < src_lim) & (col_idx < tgt_lim)
        if need_batch_mask:
            b_iota = jax.lax.broadcasted_iota(jnp.int32, src_lim.shape, 0)
            mask = mask & ((g * block_batch + b_iota) < total_batch)

        # F.binary_cross_entropy with the -100 log clamp (exact for soft gt).
        log_p = jnp.maximum(jnp.log(pred), -100.0)
        log_1mp = jnp.maximum(jnp.log(1.0 - pred), -100.0)
        bce = -(gt * (log_p - log_1mp) + log_1mp)

        # Vector accumulator (resident output block); select (not multiply) so
        # garbage/NaN from masked-off or OOB-padded elements never propagates.
        acc_ref[...] += jnp.where(mask, bce, 0.0)

    return kernel


def permutation_cross_entropy_loss(pred_perm, gt_perm, src_ns, tgt_ns,
                                   *, block_batch=None):
    """JAX/Pallas equivalent of the PyTorch CrossEntropyLoss.forward."""
    # TODO(synk): the torch value-range asserts are host-side checks and are
    # not reproduced inside the kernel.
    B, N, M = pred_perm.shape
    L = N * M

    # Keep HBM dtype (bf16 stays bf16); the kernel upcasts to f32.
    pred2 = pred_perm.reshape(B, L)
    gt2 = gt_perm.reshape(B, L)
    src2 = src_ns.astype(jnp.int32).reshape(B, 1)
    tgt2 = tgt_ns.astype(jnp.int32).reshape(B, 1)

    # Precomputed flattened (row, col) indices -- tiny, resident in VMEM.
    flat = jnp.arange(L, dtype=jnp.int32)
    row_idx = (flat // M).reshape(1, L)
    col_idx = (flat % M).reshape(1, L)

    # Pick TB (batches per grid step): big enough to amortize per-step
    # overhead, small enough that 2 inputs x 2 pipeline buffers + the f32
    # accumulator fit comfortably under v5e's 16 MiB default scoped VMEM.
    if block_batch is None:
        target_elems = 256 * 1024                      # ~1 MiB f32 per buffer
        tb_ideal = max(1, target_elems // max(L, 1))
        if B <= tb_ideal:
            TB = B
        else:
            TB = max(8, (tb_ideal // 8) * 8)           # keep sublane-aligned
    else:
        TB = int(block_batch)
    if TB != B and TB % 8 != 0:
        TB = max(8, (TB // 8) * 8)                     # enforce tiling rule
    TB = min(TB, B) if TB >= B else TB

    grid = (pl.cdiv(B, TB),)

    acc = pl.pallas_call(
        _make_kernel(B, TB),
        out_shape=jax.ShapeDtypeStruct((TB, L), jnp.float32),
        grid=grid,
        in_specs=[
            pl.BlockSpec((TB, L), lambda g: (g, 0)),   # pred
            pl.BlockSpec((TB, L), lambda g: (g, 0)),   # gt
            pl.BlockSpec((TB, 1), lambda g: (g, 0)),   # src_ns limits
            pl.BlockSpec((TB, 1), lambda g: (g, 0)),   # tgt_ns limits
            pl.BlockSpec((1, L), lambda g: (0, 0)),    # row indices (resident)
            pl.BlockSpec((1, L), lambda g: (0, 0)),    # col indices (resident)
        ],
        out_specs=pl.BlockSpec((TB, L), lambda g: (0, 0)),
        compiler_params=pltpu.CompilerParams(
            dimension_semantics=("arbitrary",)),
    )(pred2, gt2, src2, tgt2, row_idx, col_idx)

    n_sum = jnp.sum(src_ns.astype(jnp.float32))
    return (jnp.sum(acc) / n_sum).astype(jnp.float32)


def _reference(pred_perm, gt_perm, src_ns, tgt_ns):
    """Pure-JAX reference for validation."""
    pred = pred_perm.astype(jnp.float32)
    gt = gt_perm.astype(jnp.float32)
    B = pred.shape[0]
    total = 0.0
    for b in range(B):
        p = pred[b, : int(src_ns[b]), : int(tgt_ns[b])]
        g = gt[b, : int(src_ns[b]), : int(tgt_ns[b])]
        lp = jnp.maximum(jnp.log(p), -100.0)
        l1p = jnp.maximum(jnp.log(1.0 - p), -100.0)
        total = total + jnp.sum(-(g * lp + (1.0 - g) * l1p))
    return total / jnp.sum(src_ns).astype(jnp.float32)


if __name__ == "__main__":
    key = jax.random.PRNGKey(0)

    # --- Test 1: hard (0/1) permutation targets, B == TB (single block) ---
    B, N, M = 2, 8, 8
    k1, k2, k3, k4, k5 = jax.random.split(key, 5)
    pred_perm = jax.random.uniform(k1, (B, N, M), dtype=jnp.float32,
                                   minval=0.01, maxval=0.99)
    gt = jnp.zeros((B, N, M), dtype=jnp.float32)
    for b in range(B):
        perm = jax.random.permutation(jax.random.fold_in(k2, b), M)
        gt = gt.at[b, jnp.arange(N), perm[:N]].set(1.0)
    src_ns = jnp.array([8, 6], dtype=jnp.int32)
    tgt_ns = jnp.array([8, 7], dtype=jnp.int32)

    loss = permutation_cross_entropy_loss(pred_perm, gt, src_ns, tgt_ns)
    loss = jax.block_until_ready(loss)
    ref = _reference(pred_perm, gt, src_ns, tgt_ns)
    assert jnp.allclose(loss, ref, rtol=1e-4, atol=1e-5), (loss, ref)

    # --- Test 2: soft targets, ragged sizes, multi-block grid with a partial
    #             last block (B=11, TB=8) ---
    B2, N2, M2 = 11, 6, 5
    pred2 = jax.random.uniform(k3, (B2, N2, M2), dtype=jnp.float32,
                               minval=0.02, maxval=0.98)
    gt2 = jax.random.uniform(k4, (B2, N2, M2), dtype=jnp.float32)
    src2 = jax.random.randint(k5, (B2,), 1, N2 + 1, dtype=jnp.int32)
    tgt2 = jax.random.randint(jax.random.fold_in(k5, 1), (B2,), 1, M2 + 1,
                              dtype=jnp.int32)

    loss2 = permutation_cross_entropy_loss(pred2, gt2, src2, tgt2,
                                           block_batch=8)
    loss2 = jax.block_until_ready(loss2)
    ref2 = _reference(pred2, gt2, src2, tgt2)
    assert jnp.allclose(loss2, ref2, rtol=1e-4, atol=1e-5), (loss2, ref2)

    print("KERNEL_OK")
</pallas_src>

<mosaic_0001>
module attributes {stable_mosaic.version = 11 : i64} {
  func.func @kernel(%arg0: i32, %arg1: memref<2x64xf32, #tpu.memory_space<vmem>>, %arg2: memref<2x64xf32, #tpu.memory_space<vmem>>, %arg3: memref<2x1xi32, #tpu.memory_space<vmem>>, %arg4: memref<2x1xi32, #tpu.memory_space<vmem>>, %arg5: memref<1x64xi32, #tpu.memory_space<vmem>>, %arg6: memref<1x64xi32, #tpu.memory_space<vmem>>, %arg7: memref<2x64xf32, #tpu.memory_space<vmem>>) attributes {dimension_semantics = [#tpu.dimension_semantics<arbitrary>], iteration_bounds = array<i64: 1>, scalar_prefetch = 0 : i64, scratch_operands = 0 : i64, tpu.core_type = #tpu.core_type<tc>, window_params = [{transform_indices = @transform_0, window_bounds = array<i64: 2, 64>}, {transform_indices = @transform_1, window_bounds = array<i64: 2, 64>}, {transform_indices = @transform_2, window_bounds = array<i64: 2, 1>}, {transform_indices = @transform_3, window_bounds = array<i64: 2, 1>}, {pipeline_mode = #tpu.pipeline_mode<synchronous>, transform_indices = @transform_4, window_bounds = array<i64: 1, 64>}, {pipeline_mode = #tpu.pipeline_mode<synchronous>, transform_indices = @transform_5, window_bounds = array<i64: 1, 64>}, {pipeline_mode = #tpu.pipeline_mode<synchronous>, transform_indices = @transform_6, window_bounds = array<i64: 2, 64>}]} {
    %c0_i32 = arith.constant 0 : i32
    %0 = arith.cmpi eq, %arg0, %c0_i32 : i32
    %1 = arith.extui %0 : i1 to i32
    %c0_i32_0 = arith.constant 0 : i32
    %2 = arith.cmpi ne, %1, %c0_i32_0 : i32
    scf.if %2 {
      %cst_20 = arith.constant 0.000000e+00 : f32
      %34 = vector.broadcast %cst_20 : f32 to vector<2x64xf32>
      %c0_21 = arith.constant 0 : index
      %c0_22 = arith.constant 0 : index
      %35 = vector.load %arg7[%c0_21, %c0_22] : memref<2x64xf32, #tpu.memory_space<vmem>>, vector<2x64xf32>
      tpu.vector_store %arg7[%c0_21, %c0_22], %34 {strides = array<i32>} : memref<2x64xf32, #tpu.memory_space<vmem>>, vector<2x64xf32>,
    } else {
    }
    %c0 = arith.constant 0 : index
    %c0_1 = arith.constant 0 : index
    %3 = vector.load %arg1[%c0, %c0_1] : memref<2x64xf32, #tpu.memory_space<vmem>>, vector<2x64xf32>
    %c0_2 = arith.constant 0 : index
    %c0_3 = arith.constant 0 : index
    %4 = vector.load %arg2[%c0_2, %c0_3] : memref<2x64xf32, #tpu.memory_space<vmem>>, vector<2x64xf32>
    %c0_4 = arith.constant 0 : index
    %c0_5 = arith.constant 0 : index
    %5 = vector.load %arg3[%c0_4, %c0_5] : memref<2x1xi32, #tpu.memory_space<vmem>>, vector<2x1xi32>
    %c0_6 = arith.constant 0 : index
    %c0_7 = arith.constant 0 : index
    %6 = vector.load %arg4[%c0_6, %c0_7] : memref<2x1xi32, #tpu.memory_space<vmem>>, vector<2x1xi32>
    %c0_8 = arith.constant 0 : index
    %c0_9 = arith.constant 0 : index
    %7 = vector.load %arg5[%c0_8, %c0_9] : memref<1x64xi32, #tpu.memory_space<vmem>>, vector<1x64xi32>
    %c0_10 = arith.constant 0 : index
    %c0_11 = arith.constant 0 : index
    %8 = vector.load %arg6[%c0_10, %c0_11] : memref<1x64xi32, #tpu.memory_space<vmem>>, vector<1x64xi32>
    %9 = vector.broadcast %7 : vector<1x64xi32> to vector<2x64xi32>
    %10 = vector.broadcast %5 : vector<2x1xi32> to vector<2x64xi32>
    %11 = arith.cmpi slt, %9, %10 : vector<2x64xi32>
    %12 = vector.broadcast %8 : vector<1x64xi32> to vector<2x64xi32>
    %13 = vector.broadcast %6 : vector<2x1xi32> to vector<2x64xi32>
    %14 = arith.cmpi slt, %12, %13 : vector<2x64xi32>
    %15 = arith.andi %11, %14 : vector<2x64xi1>
    %16 = math.log %3 : vector<2x64xf32>
    %cst = arith.constant -1.000000e+02 : f32
    %17 = vector.broadcast %cst : f32 to vector<2x64xf32>
    %18 = arith.maximumf %16, %17 : vector<2x64xf32>
    %cst_12 = arith.constant 1.000000e+00 : f32
    %19 = vector.broadcast %cst_12 : f32 to vector<2x64xf32>
    %20 = arith.subf %19, %3 : vector<2x64xf32>
    %21 = math.log %20 : vector<2x64xf32>
    %cst_13 = arith.constant -1.000000e+02 : f32
    %22 = vector.broadcast %cst_13 : f32 to vector<2x64xf32>
    %23 = arith.maximumf %21, %22 : vector<2x64xf32>
    %24 = arith.subf %18, %23 : vector<2x64xf32>
    %25 = arith.mulf %4, %24 : vector<2x64xf32>
    %26 = arith.addf %25, %23 : vector<2x64xf32>
    %cst_14 = arith.constant 0.000000e+00 : f32
    %27 = vector.broadcast %cst_14 : f32 to vector<2x64xf32>
    %28 = arith.subf %27, %26 : vector<2x64xf32>
    %c0_15 = arith.constant 0 : index
    %c0_16 = arith.constant 0 : index
    %29 = vector.load %arg7[%c0_15, %c0_16] : memref<2x64xf32, #tpu.memory_space<vmem>>, vector<2x64xf32>
    %cst_17 = arith.constant 0.000000e+00 : f32
    %30 = vector.broadcast %cst_17 : f32 to vector<2x64xf32>
    %31 = arith.select %15, %28, %30 : vector<2x64xi1>, vector<2x64xf32>
    %32 = arith.addf %29, %31 : vector<2x64xf32>
    %c0_18 = arith.constant 0 : index
    %c0_19 = arith.constant 0 : index
    %33 = vector.load %arg7[%c0_18, %c0_19] : memref<2x64xf32, #tpu.memory_space<vmem>>, vector<2x64xf32>
    tpu.vector_store %arg7[%c0_18, %c0_19], %32 {strides = array<i32>} : memref<2x64xf32, #tpu.memory_space<vmem>>, vector<2x64xf32>,
    return
  }
  func.func @transform_0(%arg0: i32) -> (i32, i32) {
    %c0_i32 = arith.constant 0 : i32
    %c0_i32_0 = arith.constant 0 : i32
    return %arg0, %c0_i32 : i32, i32
  }
  func.func @transform_1(%arg0: i32) -> (i32, i32) {
    %c0_i32 = arith.constant 0 : i32
    %c0_i32_0 = arith.constant 0 : i32
    return %arg0, %c0_i32 : i32, i32
  }
  func.func @transform_2(%arg0: i32) -> (i32, i32) {
    %c0_i32 = arith.constant 0 : i32
    %c0_i32_0 = arith.constant 0 : i32
    return %arg0, %c0_i32 : i32, i32
  }
  func.func @transform_3(%arg0: i32) -> (i32, i32) {
    %c0_i32 = arith.constant 0 : i32
    %c0_i32_0 = arith.constant 0 : i32
    return %arg0, %c0_i32 : i32, i32
  }
  func.func @transform_4(%arg0: i32) -> (i32, i32) {
    %c0_i32 = arith.constant 0 : i32
    %c0_i32_0 = arith.constant 0 : i32
    %c0_i32_1 = arith.constant 0 : i32
    return %c0_i32, %c0_i32_0 : i32, i32
  }
  func.func @transform_5(%arg0: i32) -> (i32, i32) {
    %c0_i32 = arith.constant 0 : i32
    %c0_i32_0 = arith.constant 0 : i32
    %c0_i32_1 = arith.constant 0 : i32
    return %c0_i32, %c0_i32_0 : i32, i32
  }
  func.func @transform_6(%arg0: i32) -> (i32, i32) {
    %c0_i32 = arith.constant 0 : i32
    %c0_i32_0 = arith.constant 0 : i32
    %c0_i32_1 = arith.constant 0 : i32
    return %c0_i32, %c0_i32_0 : i32, i32
  }
}

</mosaic_0001>

<llo_original>
// kernel: tpu_custom_call.1
$region0: #{tpu_custom_call.1}
  #allocation0 [shape = 'u32[]', space=smem, size = 0x4, offset = 0x4, fixed_abs, tag = 'smem constant byte address 0x4 - core index']
  #allocation1 [shape = 'u32[144,128]{1,0:T(1,128)}', space=vmem, size = 0x12000, scoped, tag = 'internal scratch']
  %s0 = inlined_call_operand.vmem [shape: f32[2,64], index: 0, kind: input, shape index: {}]
  %s1 = inlined_call_operand.vmem [shape: f32[2,64], index: 1, kind: input, shape index: {}]
  %s2 = inlined_call_operand.vmem [shape: s32[2,1], index: 2, kind: input, shape index: {}]
  %s3 = inlined_call_operand.vmem [shape: s32[2,1], index: 3, kind: input, shape index: {}]
  %s4 = inlined_call_operand.vmem [shape: s32[1,64], index: 4, kind: input, shape index: {}]
  %s5 = inlined_call_operand.vmem [shape: s32[1,64], index: 5, kind: input, shape index: {}]
  %s6 = inlined_call_operand.hbm [shape: f32[2,64], index: 6, kind: output, shape index: {}]
  %s7 = sld [smem:[#allocation0]]
  $region38: #{tpu_custom_call.1} parent=0
    _
  %s9 = ssub.s32 1, %s7
  %s10 = scalar_select 0, %s9, %s7
  $region1: #{tpu_custom_call.1} parent=0
    #allocation2 [shape = 'u8[1024]{0}', space=vmem, size = 0x400, scoped, tag = 'output window, operand 0, single buffered']
    #allocation3 [shape = 's32[1]{0}', space=sflag, size = 0x4, scoped, tag = 'scoped memory for tpu_custom_call.1']
    %11 = vsyncpa [#allocation3], 0
    // Predicated region
    $region2: #{tpu_custom_call.1} parent=1 // pred_check
      _
    $region3: #{tpu_custom_call.1} parent=1 // pred_check_branch
      %13 = sbr.rel (0) target = $region5
    $region4: #{tpu_custom_call.1} parent=1 // pred_region
      _
    $region5: #{tpu_custom_call.1} parent=1 // pred_fallthru
      _
    // Predicated region
    $region6: #{tpu_custom_call.1} parent=1 // pred_check
      _
    $region7: #{tpu_custom_call.1} parent=1 // pred_check_branch
      %15 = sbr.rel (0) target = $region9
    $region8: #{tpu_custom_call.1} parent=1 // pred_region
      _
    $region9: #{tpu_custom_call.1} parent=1 // pred_fallthru
      _
    // Predicated region
    $region10: #{tpu_custom_call.1} parent=1 // pred_check
      _
    $region11: #{tpu_custom_call.1} parent=1 // pred_check_branch
      %17 = sbr.rel (0) target = $region13
    $region12: #{tpu_custom_call.1} parent=1 // pred_region
      _
    $region13: #{tpu_custom_call.1} parent=1 // pred_fallthru
      _
    // Predicated region
    $region14: #{tpu_custom_call.1} parent=1 // pred_check
      _
    $region15: #{tpu_custom_call.1} parent=1 // pred_check_branch
      %19 = sbr.rel (0) target = $region17
    $region16: #{tpu_custom_call.1} parent=1 // pred_region
      _
    $region17: #{tpu_custom_call.1} parent=1 // pred_fallthru
      _
    // Predicated region
    $region18: #{tpu_custom_call.1} parent=1 // pred_check
      _
    $region19: #{tpu_custom_call.1} parent=1 // pred_check_branch
      %21 = sbr.rel (0) target = $region21
    $region20: #{tpu_custom_call.1} parent=1 // pred_region
      _
    $region21: #{tpu_custom_call.1} parent=1 // pred_fallthru
      _
    // Predicated region
    $region22: #{tpu_custom_call.1} parent=1 // pred_check
      _
    $region23: #{tpu_custom_call.1} parent=1 // pred_check_branch
      %23 = sbr.rel (0) target = $region25
    $region24: #{tpu_custom_call.1} parent=1 // pred_region
      _
    $region25: #{tpu_custom_call.1} parent=1 // pred_fallthru
      _
    %p24 = scmp.eq.s32.totalorder 0, 0
    // Predicated region
    $region26: #{tpu_custom_call.1} parent=1 // pred_check
      %p25 = pneg %p24
    $region27: #{tpu_custom_call.1} parent=1 // pred_check_branch
      %27 = sbr.rel (%p25) target = $region29
    $region28: #{tpu_custom_call.1} parent=1 // pred_region
      %vm28 = vcmask 517120
      %29 = vst.msk [vmem:[#allocation2] sm:$0x3] %vm28, 0.0
    $region29: #{tpu_custom_call.1} parent=1 // pred_fallthru
      _
    %v30 = vld [vmem:[%s0] sm:$0x3]
    %v31 = vld [vmem:[%s1] sm:$0x3]
    %v32 = vld [vmem:[%s2] sm:$0x3]
    %v33 = vld [vmem:[%s3] sm:$0x3]
    %v34 = vld [vmem:[%s4] sm:$0x1]
    %v35 = vld [vmem:[%s5] sm:$0x1]
    %v36 = vlaneseq
    %v37 = vshrl.u32 %v36, 7
    %v38 = vsub.s32 0, %v37
    %v39 = vrot.slane %v34, %v38
    %40 = vset.pattern.permute.xlu0 0
    %41 = vperm.xlu0 %40, %v32
    %v42 = vpop.permute.xlu0 %41
    %vm43 = vcmp.lt.s32.totalorder %v39, %v42
    %v44 = vlaneseq
    %v45 = vshrl.u32 %v44, 7
    %v46 = vsub.s32 0, %v45
    %v47 = vrot.slane %v35, %v46
    %48 = vset.pattern.permute.xlu0 0
    %49 = vperm.xlu0 %48, %v33
    %v50 = vpop.permute.xlu0 %49
    %vm51 = vcmp.lt.s32.totalorder %v47, %v50
    %vm52 = vmand %vm43, %vm51
    %v53 = vlog2.pop %v30
    %v54 = vmul.f32 %v53, 0.6931472
    %v55 = vmax.f32 %v54, -100.0
    %v56 = vsub.f32 1.0, %v30
    %v57 = vlog2.pop %v56
    %v58 = vmul.f32 %v57, 0.6931472
    %v59 = vmax.f32 %v58, -100.0
    %v60 = vsub.f32 %v55, %v59
    %v61 = vmul.f32 %v31, %v60
    %v62 = vadd.f32 %v61, %v59
    %v63 = vsub.f32 0.0, %v62
    %v64 = vld [vmem:[#allocation2] sm:$0x3]
    %v65 = vsel %vm52, %v63, 0.0
    %v66 = vadd.f32 %v64, %v65
    %vm67 = vcmask 517120
    %68 = vst.msk [vmem:[#allocation2] sm:$0x3] %vm67, %v66
    // Predicated region
    $region30: #{tpu_custom_call.1} parent=1 // pred_check
      _
    $region31: #{tpu_custom_call.1} parent=1 // pred_check_branch
      %70 = sbr.rel (0) target = $region33
    $region32: #{tpu_custom_call.1} parent=1 // pred_region
      %s72 = ssub.s32 32, 32
      %73 = vsyncadd [#allocation3], %s72
      %s75 = sshll.u32 [#allocation2], 4
      %s76 = int_to_ptr.vmem [resolvable:$true] %s75
      %78 = dma.vmem_to_hbm [thread:$0]  %s76, 32, %s6, [#allocation3]
    $region33: #{tpu_custom_call.1} parent=1 // pred_fallthru
      _
    // Predicated region
    $region34: #{tpu_custom_call.1} parent=1 // pred_check
      _
    $region35: #{tpu_custom_call.1} parent=1 // pred_check_branch
      %80 = sbr.rel (0) target = $region37
    $region36: #{tpu_custom_call.1} parent=1 // pred_region
      %81 = dma.done [#allocation3], 32
    $region37: #{tpu_custom_call.1} parent=1 // pred_fallthru
      _
    %82 = vsyncpa [#allocation3], 1

</llo_original>
